<compile_context>
chip_gen: v5e
topology: v5e:2x2
jax: 0.10.0
libtpu: 0.0.40
codegen_flags: <defaults>
</compile_context>

<pallas_src>
import math

import jax
import jax.numpy as jnp
from jax.experimental import pallas as pl
from jax.experimental.pallas import tpu as pltpu

_LANE = 128
_SUBLANE = 8
_BLOCK_BUDGET_BYTES = 2 * 1024 * 1024     # per-stream, per-block (x / pe / out)
_VMEM_LIMIT_BYTES = 32 * 1024 * 1024      # safe on v5e/v6e (128 MiB phys) and v7x (64 MiB phys)


def make_positional_encoding(d_model: int, max_seq_length: int) -> jnp.ndarray:
    """Deterministic sinusoidal PE buffer, shape (1, max_seq_length, d_model)."""
    position = jnp.arange(0, max_seq_length, dtype=jnp.float32)[:, None]            # (L, 1)
    div_term = jnp.exp(
        jnp.arange(0, d_model, 2, dtype=jnp.float32) * -(math.log(10000.0) / d_model)
    )                                                                                # (D/2,)
    angles = position * div_term                                                     # (L, D/2)
    pe = jnp.zeros((max_seq_length, d_model), dtype=jnp.float32)
    pe = pe.at[:, 0::2].set(jnp.sin(angles))
    pe = pe.at[:, 1::2].set(jnp.cos(angles))
    return pe[None, :, :]                                                            # (1, L, D)


def _add_pe_kernel(x_ref, pe_ref, o_ref):
    # x_ref: (1, tS, D) or (B, tL); pe_ref: same trailing shape with leading 1 (broadcasts).
    o_ref[...] = x_ref[...] + pe_ref[...]


def _largest_divisor(n: int, unit: int, cap: int):
    """Largest d with d % unit == 0, d | n, d <= cap. None if no such d."""
    cap = min(n, cap)
    best = None
    d = unit
    while d <= cap:
        if n % d == 0:
            best = d
        d += unit
    return best


def positional_encoding_forward(x: jnp.ndarray, pe: jnp.ndarray) -> jnp.ndarray:
    """x: (B, S, D), pe: (1, max_seq_length, D). Returns x + pe[:, :S]."""
    B, S, D = x.shape
    itemsize = jnp.dtype(x.dtype).itemsize
    # Glue: static slice to the active sequence length + dtype-match pe to x.
    pe_sliced = jax.lax.slice(pe, (0, 0, 0), (1, S, D)).astype(x.dtype)

    if D % _LANE == 0:
        # --- 3D path: D is already lane-dense; tile the sequence dimension. ---
        cap_rows = max(_SUBLANE, _BLOCK_BUDGET_BYTES // (D * itemsize))
        tS = _largest_divisor(S, _SUBLANE, cap_rows) or S   # full extent is always legal
        grid = (S // tS, B)                                  # batch innermost -> pe tile reused
        return pl.pallas_call(
            _add_pe_kernel,
            out_shape=jax.ShapeDtypeStruct((B, S, D), x.dtype),
            grid_spec=pltpu.PrefetchScalarGridSpec(
                num_scalar_prefetch=0,
                grid=grid,
                in_specs=[
                    pl.BlockSpec((1, tS, D), lambda s, b: (b, s, 0)),   # x tile
                    pl.BlockSpec((1, tS, D), lambda s, b: (0, s, 0)),   # pe shared across batch
                ],
                out_specs=pl.BlockSpec((1, tS, D), lambda s, b: (b, s, 0)),
            ),
            compiler_params=pltpu.CompilerParams(
                dimension_semantics=("parallel", "parallel"),
                vmem_limit_bytes=_VMEM_LIMIT_BYTES,
            ),
            input_output_aliases={0: 0},
        )(x, pe_sliced)

    # --- Flattened path: small / non-128-multiple d_model (e.g. 32). ---
    # Fold (S, D) into one lane-dense axis so loads/stores are unmasked.
    L = S * D
    x2 = x.reshape(B, L)
    pe2 = pe_sliced.reshape(1, L)
    if L % _LANE == 0:
        cap_l = max(_LANE, _BLOCK_BUDGET_BYTES // (B * itemsize))
        tL = _largest_divisor(L, _LANE, cap_l) or L
    else:
        tL = L                                               # full extent is always legal
    grid = (L // tL,)
    out2 = pl.pallas_call(
        _add_pe_kernel,
        out_shape=jax.ShapeDtypeStruct((B, L), x.dtype),
        grid_spec=pltpu.PrefetchScalarGridSpec(
            num_scalar_prefetch=0,
            grid=grid,
            in_specs=[
                pl.BlockSpec((B, tL), lambda j: (0, j)),     # all batches in one block
                pl.BlockSpec((1, tL), lambda j: (0, j)),     # pe broadcast across batch
            ],
            out_specs=pl.BlockSpec((B, tL), lambda j: (0, j)),
        ),
        compiler_params=pltpu.CompilerParams(
            dimension_semantics=("parallel",),
            vmem_limit_bytes=_VMEM_LIMIT_BYTES,
        ),
        input_output_aliases={0: 0},
    )(x2, pe2)
    return out2.reshape(B, S, D)


if __name__ == "__main__":
    key = jax.random.PRNGKey(0)
    k1, k2 = jax.random.split(key)

    # Case 1: module-scale toy shapes (batch=2, seq=8, d_model=32) -> flattened lane-dense path.
    B, S, D, MAX_SEQ = 2, 8, 32, 16
    x = jax.random.normal(k1, (B, S, D), dtype=jnp.float32)
    pe = make_positional_encoding(d_model=D, max_seq_length=MAX_SEQ)
    ref = jax.block_until_ready(x + pe[:, :S])       # reference BEFORE the call (x may be aliased)
    out = jax.block_until_ready(positional_encoding_forward(x, pe))
    assert out.shape == (B, S, D)
    assert jnp.allclose(out, ref, atol=1e-6), "mismatch vs reference (flattened path)"

    # Case 2: lane-dense d_model -> sequence-tiled 3D path.
    B2, S2, D2, MAX2 = 2, 16, 128, 32
    x2 = jax.random.normal(k2, (B2, S2, D2), dtype=jnp.float32)
    pe2 = make_positional_encoding(d_model=D2, max_seq_length=MAX2)
    ref2 = jax.block_until_ready(x2 + pe2[:, :S2])
    out2 = jax.block_until_ready(positional_encoding_forward(x2, pe2))
    assert out2.shape == (B2, S2, D2)
    assert jnp.allclose(out2, ref2, atol=1e-6), "mismatch vs reference (3D path)"

    print("KERNEL_OK")
</pallas_src>

<mosaic_0001>
module attributes {stable_mosaic.version = 11 : i64} {
  func.func @_add_pe_kernel(%arg0: i32, %arg1: memref<2x256xf32, #tpu.memory_space<vmem>>, %arg2: memref<1x256xf32, #tpu.memory_space<vmem>>, %arg3: memref<2x256xf32, #tpu.memory_space<vmem>>) attributes {dimension_semantics = [#tpu.dimension_semantics<parallel>], iteration_bounds = array<i64: 1>, scalar_prefetch = 0 : i64, scratch_operands = 0 : i64, tpu.core_type = #tpu.core_type<tc>, window_params = [{transform_indices = @transform_0, window_bounds = array<i64: 2, 256>}, {transform_indices = @transform_1, window_bounds = array<i64: 1, 256>}, {transform_indices = @transform_2, window_bounds = array<i64: 2, 256>}]} {
    %c0 = arith.constant 0 : index
    %c0_0 = arith.constant 0 : index
    %0 = vector.load %arg1[%c0, %c0_0] : memref<2x256xf32, #tpu.memory_space<vmem>>, vector<2x256xf32>
    %c0_1 = arith.constant 0 : index
    %c0_2 = arith.constant 0 : index
    %1 = vector.load %arg2[%c0_1, %c0_2] : memref<1x256xf32, #tpu.memory_space<vmem>>, vector<1x256xf32>
    %2 = vector.broadcast %1 : vector<1x256xf32> to vector<2x256xf32>
    %3 = arith.addf %0, %2 : vector<2x256xf32>
    %c0_3 = arith.constant 0 : index
    %c0_4 = arith.constant 0 : index
    %4 = vector.load %arg3[%c0_3, %c0_4] : memref<2x256xf32, #tpu.memory_space<vmem>>, vector<2x256xf32>
    tpu.vector_store %arg3[%c0_3, %c0_4], %3 {strides = array<i32>} : memref<2x256xf32, #tpu.memory_space<vmem>>, vector<2x256xf32>,
    return
  }
  func.func @transform_0(%arg0: i32) -> (i32, i32) {
    %c0_i32 = arith.constant 0 : i32
    %c0_i32_0 = arith.constant 0 : i32
    return %c0_i32, %arg0 : i32, i32
  }
  func.func @transform_1(%arg0: i32) -> (i32, i32) {
    %c0_i32 = arith.constant 0 : i32
    %c0_i32_0 = arith.constant 0 : i32
    return %c0_i32, %arg0 : i32, i32
  }
  func.func @transform_2(%arg0: i32) -> (i32, i32) {
    %c0_i32 = arith.constant 0 : i32
    %c0_i32_0 = arith.constant 0 : i32
    return %c0_i32, %arg0 : i32, i32
  }
}

</mosaic_0001>

<llo_original>
// kernel: tpu_custom_call.1
$region0: #{tpu_custom_call.1}
  #allocation0 [shape = 'u32[]', space=smem, size = 0x4, offset = 0x4, fixed_abs, tag = 'smem constant byte address 0x4 - core index']
  #allocation1 [shape = 'u32[72,128]{1,0:T(1,128)}', space=vmem, size = 0x9000, scoped, tag = 'internal scratch']
  %s0 = inlined_call_operand.hbm [shape: f32[2,256], index: 0, kind: input, shape index: {}, may-alias: {0,2}]
  %s1 = inlined_call_operand.vmem [shape: f32[1,256], index: 1, kind: input, shape index: {}]
  %s2 = inlined_call_operand.hbm [shape: f32[2,256], index: 2, kind: output, shape index: {}, may-alias: {0,2}]
  %s3 = sld [smem:[#allocation0]]
  $region22: #{tpu_custom_call.1} parent=0
    _
  %s5 = ssub.s32 1, %s3
  %s6 = scalar_select 0, %s5, %s3
  $region1: #{tpu_custom_call.1} parent=0
    #allocation2 [shape = 'u8[2048]{0}', space=vmem, size = 0x800, scoped, tag = 'input window, operand 0, single buffered']
    #allocation3 [shape = 's32[1]{0}', space=sflag, size = 0x4, scoped, tag = 'scoped memory for tpu_custom_call.1']
    #allocation4 [shape = 's32[1]{0}', space=sflag, size = 0x4, scoped, tag = 'scoped memory for tpu_custom_call.1']
    #allocation5 [shape = 'u8[2048]{0}', space=vmem, size = 0x800, scoped, tag = 'output window, operand 0, single buffered']
    %7 = vsyncpa [#allocation3], 0
    %8 = vsyncpa [#allocation4], 0
    // Predicated region
    $region2: #{tpu_custom_call.1} parent=1 // pred_check
      _
    $region3: #{tpu_custom_call.1} parent=1 // pred_check_branch
      %10 = sbr.rel (0) target = $region5
    $region4: #{tpu_custom_call.1} parent=1 // pred_region
      %12 = vsyncadd [#allocation3], 0
      %s14 = sshll.u32 %s0, 4
      %s15 = int_to_ptr.hbm [resolvable:$true] %s14
      %s16 = sshll.u32 [#allocation2], 4
      %s17 = int_to_ptr.vmem [resolvable:$true] %s16
      %19 = dma.hbm_to_vmem [thread:$0]  %s15, 64, %s17, [#allocation3]
    $region5: #{tpu_custom_call.1} parent=1 // pred_fallthru
      _
    // Predicated region
    $region6: #{tpu_custom_call.1} parent=1 // pred_check
      _
    $region7: #{tpu_custom_call.1} parent=1 // pred_check_branch
      %21 = sbr.rel (0) target = $region9
    $region8: #{tpu_custom_call.1} parent=1 // pred_region
      _
    $region9: #{tpu_custom_call.1} parent=1 // pred_fallthru
      _
    // Predicated region
    $region10: #{tpu_custom_call.1} parent=1 // pred_check
      _
    $region11: #{tpu_custom_call.1} parent=1 // pred_check_branch
      %23 = sbr.rel (0) target = $region13
    $region12: #{tpu_custom_call.1} parent=1 // pred_region
      %25 = dma.done [#allocation3], 64
    $region13: #{tpu_custom_call.1} parent=1 // pred_fallthru
      _
    %v26 = vld [vmem:[#allocation2] sm:$0xf]
    %v27 = vld [vmem:[%s1] sm:$0x3]
    %v29 = vperm.slane %v27, 0
    %v30 = vperm.slane %v27, 1
    %v31 = vrot.slane %v30, 6
    %vm32 = vcmask 1041408
    %v33 = vsel %vm32, %v29, %v31
    %v35 = vadd.f32 %v26, %v33
    %36 = vst [vmem:[#allocation5] sm:$0xf] %v35
    // Predicated region
    $region14: #{tpu_custom_call.1} parent=1 // pred_check
      _
    $region15: #{tpu_custom_call.1} parent=1 // pred_check_branch
      %38 = sbr.rel (0) target = $region17
    $region16: #{tpu_custom_call.1} parent=1 // pred_region
      %40 = vsyncadd [#allocation4], 0
      %s42 = sshll.u32 [#allocation5], 4
      %s43 = int_to_ptr.vmem [resolvable:$true] %s42
      %s44 = sshll.u32 %s2, 4
      %s45 = int_to_ptr.hbm [resolvable:$true] %s44
      %47 = dma.vmem_to_hbm [thread:$0]  %s43, 64, %s45, [#allocation4]
    $region17: #{tpu_custom_call.1} parent=1 // pred_fallthru
      _
    // Predicated region
    $region18: #{tpu_custom_call.1} parent=1 // pred_check
      _
    $region19: #{tpu_custom_call.1} parent=1 // pred_check_branch
      %49 = sbr.rel (0) target = $region21
    $region20: #{tpu_custom_call.1} parent=1 // pred_region
      %51 = dma.done [#allocation4], 64
    $region21: #{tpu_custom_call.1} parent=1 // pred_fallthru
      _
    %52 = vsyncpa [#allocation3], 1
    %53 = vsyncpa [#allocation4], 1

</llo_original>
